<compile_context>
chip_gen: v5e
topology: v5e:2x2
jax: 0.10.0
libtpu: 0.0.40
codegen_flags: <defaults>
</compile_context>

<pallas_src>
import functools

import jax
import jax.numpy as jnp
from jax import lax
from jax.experimental import pallas as pl
from jax.experimental.pallas import tpu as pltpu


def _round_up(x: int, m: int) -> int:
    return ((x + m - 1) // m) * m


def _linear_kernel(x_ref, w_ref, b_ref, o_ref, acc_ref):
    # x_ref : [tm, tk]   activations tile
    # w_ref : [tn, tk]   weight tile ([N, K] layout, contraction on K -> MXU native)
    # b_ref : [1,  tn]   bias tile
    # o_ref : [tm, tn]   output tile
    # acc_ref: [tm, tn]  f32 accumulator scratch (persists across the K grid axis)
    k = pl.program_id(2)

    @pl.when(k == 0)
    def _():
        acc_ref[...] = jnp.zeros_like(acc_ref)

    acc_ref[...] += lax.dot_general(
        x_ref[...],
        w_ref[...],
        dimension_numbers=(((1,), (1,)), ((), ())),
        preferred_element_type=jnp.float32,
    )

    @pl.when(k == pl.num_programs(2) - 1)
    def _():
        # Bias add + cast once, in f32, in the epilogue only.
        o_ref[...] = (acc_ref[...] + b_ref[...].astype(jnp.float32)).astype(o_ref.dtype)


@functools.partial(jax.jit, static_argnames=("tm", "tn", "tk"))
def _linear_pallas(x2d, weight, bias, *, tm, tn, tk):
    M, K = x2d.shape
    N = weight.shape[0]

    # Pad so blocks satisfy the (8, 128) constraint and the output is lane-dense.
    tm_eff = min(tm, _round_up(M, 8))
    tn_eff = min(tn, _round_up(N, 128))
    tk_eff = min(tk, _round_up(K, 128))
    Mp = _round_up(M, tm_eff)
    Np = _round_up(N, tn_eff)
    Kp = _round_up(K, tk_eff)

    x_p = x2d if (Mp == M and Kp == K) else jnp.pad(x2d, ((0, Mp - M), (0, Kp - K)))
    w_p = weight if (Np == N and Kp == K) else jnp.pad(weight, ((0, Np - N), (0, Kp - K)))
    b_p = (bias if Np == N else jnp.pad(bias, (0, Np - N))).reshape(1, Np)

    grid = (Mp // tm_eff, Np // tn_eff, Kp // tk_eff)

    itemsize = x2d.dtype.itemsize
    cost = pl.CostEstimate(
        flops=2 * Mp * Kp * Np,
        bytes_accessed=(Mp * Kp + Np * Kp + Mp * Np) * itemsize + Np * bias.dtype.itemsize,
        transcendentals=0,
    )

    out_p = pl.pallas_call(
        _linear_kernel,
        out_shape=jax.ShapeDtypeStruct((Mp, Np), x2d.dtype),
        grid_spec=pltpu.PrefetchScalarGridSpec(
            num_scalar_prefetch=0,
            grid=grid,
            in_specs=[
                pl.BlockSpec((tm_eff, tk_eff), lambda i, j, k: (i, k),
                             memory_space=pltpu.VMEM),
                pl.BlockSpec((tn_eff, tk_eff), lambda i, j, k: (j, k),
                             memory_space=pltpu.VMEM),
                pl.BlockSpec((1, tn_eff), lambda i, j, k: (0, j),
                             memory_space=pltpu.VMEM),
            ],
            out_specs=pl.BlockSpec((tm_eff, tn_eff), lambda i, j, k: (i, j),
                                   memory_space=pltpu.VMEM),
            scratch_shapes=[pltpu.VMEM((tm_eff, tn_eff), jnp.float32)],
        ),
        compiler_params=pltpu.CompilerParams(
            dimension_semantics=("parallel", "parallel", "arbitrary"),
        ),
        cost_estimate=cost,
    )(x_p, w_p, b_p)

    return out_p[:M, :N]


def cnn_encoder_forward(features, weight, bias, *, force_pallas=False,
                        tm=256, tn=256, tk=256):
    """CNNEncoder.forward: features @ weight.T + bias.

    features: [..., input_dim]
    weight  : [embedding_dim, input_dim]   (same layout as torch nn.Linear.weight)
    bias    : [embedding_dim]
    """
    in_dim = features.shape[-1]
    out_dim = weight.shape[0]
    lead_shape = features.shape[:-1]

    x2d = features.reshape(-1, in_dim)  # [M, K]
    M = x2d.shape[0]

    # Tiny problems: the pallas_call fixed cost dwarfs the matmul -> let XLA fuse it.
    if not force_pallas and (2 * M * in_dim * out_dim) < (1 << 21):
        out2d = x2d @ weight.T + bias
    else:
        out2d = _linear_pallas(x2d, weight, bias, tm=tm, tn=tn, tk=tk)

    return out2d.reshape(*lead_shape, out_dim)


if __name__ == "__main__":
    key = jax.random.PRNGKey(0)
    k_feat, k_w, k_b, k_feat2, k_w2, k_b2 = jax.random.split(key, 6)

    # --- Small shape implied by the module: features [batch, num_regions, input_dim].
    batch, regions, input_dim, embedding_dim = 2, 8, 16, 32
    features = jax.random.normal(k_feat, (batch, regions, input_dim), dtype=jnp.float32)
    bound = 1.0 / (input_dim ** 0.5)
    weight = jax.random.uniform(k_w, (embedding_dim, input_dim), jnp.float32, -bound, bound)
    bias = jax.random.uniform(k_b, (embedding_dim,), jnp.float32, -bound, bound)

    out_small = cnn_encoder_forward(features, weight, bias, force_pallas=True)
    out_small = jax.block_until_ready(out_small)
    ref_small = features @ weight.T + bias
    assert out_small.shape == (batch, regions, embedding_dim)
    assert jnp.allclose(out_small, ref_small, atol=1e-4, rtol=1e-4)

    # --- Larger shape to exercise the tiled / gridded path (multiple M, N, K tiles).
    B2, R2, K2, N2 = 4, 160, 512, 384  # M = 640 -> 3 M-tiles, 2 N-tiles, 2 K-tiles
    features2 = jax.random.normal(k_feat2, (B2, R2, K2), dtype=jnp.float32)
    bound2 = 1.0 / (K2 ** 0.5)
    weight2 = jax.random.uniform(k_w2, (N2, K2), jnp.float32, -bound2, bound2)
    bias2 = jax.random.uniform(k_b2, (N2,), jnp.float32, -bound2, bound2)

    out_big = cnn_encoder_forward(features2, weight2, bias2)
    out_big = jax.block_until_ready(out_big)
    ref_big = (
        lax.dot_general(
            features2.reshape(-1, K2), weight2,
            dimension_numbers=(((1,), (1,)), ((), ())),
            preferred_element_type=jnp.float32,
            precision=lax.Precision.HIGHEST,
        ) + bias2
    ).reshape(B2, R2, N2)
    assert out_big.shape == (B2, R2, N2)
    assert jnp.allclose(out_big, ref_big, atol=1e-3, rtol=1e-3)

    print("KERNEL_OK")
</pallas_src>

<mosaic_0001>
module attributes {stable_mosaic.version = 11 : i64} {
  func.func @_linear_kernel(%arg0: i32, %arg1: i32, %arg2: i32, %arg3: memref<16x128xf32, #tpu.memory_space<vmem>>, %arg4: memref<128x128xf32, #tpu.memory_space<vmem>>, %arg5: memref<1x128xf32, #tpu.memory_space<vmem>>, %arg6: memref<16x128xf32, #tpu.memory_space<vmem>>, %arg7: memref<16x128xf32, #tpu.memory_space<vmem>>) attributes {dimension_semantics = [#tpu.dimension_semantics<parallel>, #tpu.dimension_semantics<parallel>, #tpu.dimension_semantics<arbitrary>], iteration_bounds = array<i64: 1, 1, 1>, scalar_prefetch = 0 : i64, scratch_operands = 1 : i64, tpu.core_type = #tpu.core_type<tc>, window_params = [{transform_indices = @transform_0, window_bounds = array<i64: 16, 128>}, {transform_indices = @transform_1, window_bounds = array<i64: 128, 128>}, {transform_indices = @transform_2, window_bounds = array<i64: 1, 128>}, {transform_indices = @transform_3, window_bounds = array<i64: 16, 128>}]} {
    %c0_i32 = arith.constant 0 : i32
    %0 = arith.cmpi eq, %arg2, %c0_i32 : i32
    %1 = arith.extui %0 : i1 to i32
    %c0_i32_0 = arith.constant 0 : i32
    %2 = arith.cmpi ne, %1, %c0_i32_0 : i32
    scf.if %2 {
      %cst_10 = arith.constant 0.000000e+00 : f32
      %12 = vector.broadcast %cst_10 : f32 to vector<16x128xf32>
      %c0_11 = arith.constant 0 : index
      %c0_12 = arith.constant 0 : index
      %13 = vector.load %arg7[%c0_11, %c0_12] : memref<16x128xf32, #tpu.memory_space<vmem>>, vector<16x128xf32>
      tpu.vector_store %arg7[%c0_11, %c0_12], %12 {strides = array<i32>} : memref<16x128xf32, #tpu.memory_space<vmem>>, vector<16x128xf32>,
    } else {
    }
    %c0 = arith.constant 0 : index
    %c0_1 = arith.constant 0 : index
    %3 = vector.load %arg7[%c0, %c0_1] : memref<16x128xf32, #tpu.memory_space<vmem>>, vector<16x128xf32>
    %c0_2 = arith.constant 0 : index
    %c0_3 = arith.constant 0 : index
    %4 = vector.load %arg3[%c0_2, %c0_3] : memref<16x128xf32, #tpu.memory_space<vmem>>, vector<16x128xf32>
    %c0_4 = arith.constant 0 : index
    %c0_5 = arith.constant 0 : index
    %5 = vector.load %arg4[%c0_4, %c0_5] : memref<128x128xf32, #tpu.memory_space<vmem>>, vector<128x128xf32>
    %cst = arith.constant dense<0.000000e+00> : vector<16x128xf32>
    %6 = tpu.matmul %4, %5, %cst {dimension_numbers = #tpu.dot_dimension_numbers<[1], [1], [0], [0], [0, 0, 1, 0], [], []>} : vector<16x128xf32>, vector<128x128xf32>, vector<16x128xf32> -> vector<16x128xf32>
    %7 = arith.addf %3, %6 : vector<16x128xf32>
    %c0_6 = arith.constant 0 : index
    %c0_7 = arith.constant 0 : index
    %8 = vector.load %arg7[%c0_6, %c0_7] : memref<16x128xf32, #tpu.memory_space<vmem>>, vector<16x128xf32>
    tpu.vector_store %arg7[%c0_6, %c0_7], %7 {strides = array<i32>} : memref<16x128xf32, #tpu.memory_space<vmem>>, vector<16x128xf32>,
    %c0_i32_8 = arith.constant 0 : i32
    %9 = arith.cmpi eq, %arg2, %c0_i32_8 : i32
    %10 = arith.extui %9 : i1 to i32
    %c0_i32_9 = arith.constant 0 : i32
    %11 = arith.cmpi ne, %10, %c0_i32_9 : i32
    scf.if %11 {
      %c0_10 = arith.constant 0 : index
      %c0_11 = arith.constant 0 : index
      %12 = vector.load %arg7[%c0_10, %c0_11] : memref<16x128xf32, #tpu.memory_space<vmem>>, vector<16x128xf32>
      %c0_12 = arith.constant 0 : index
      %c0_13 = arith.constant 0 : index
      %13 = vector.load %arg5[%c0_12, %c0_13] : memref<1x128xf32, #tpu.memory_space<vmem>>, vector<1x128xf32>
      %14 = vector.broadcast %13 : vector<1x128xf32> to vector<16x128xf32>
      %15 = arith.addf %12, %14 : vector<16x128xf32>
      %c0_14 = arith.constant 0 : index
      %c0_15 = arith.constant 0 : index
      %16 = vector.load %arg6[%c0_14, %c0_15] : memref<16x128xf32, #tpu.memory_space<vmem>>, vector<16x128xf32>
      tpu.vector_store %arg6[%c0_14, %c0_15], %15 {strides = array<i32>} : memref<16x128xf32, #tpu.memory_space<vmem>>, vector<16x128xf32>,
    } else {
    }
    return
  }
  func.func @transform_0(%arg0: i32, %arg1: i32, %arg2: i32) -> (i32, i32) {
    %c0_i32 = arith.constant 0 : i32
    return %arg0, %arg2 : i32, i32
  }
  func.func @transform_1(%arg0: i32, %arg1: i32, %arg2: i32) -> (i32, i32) {
    %c0_i32 = arith.constant 0 : i32
    return %arg1, %arg2 : i32, i32
  }
  func.func @transform_2(%arg0: i32, %arg1: i32, %arg2: i32) -> (i32, i32) {
    %c0_i32 = arith.constant 0 : i32
    %c0_i32_0 = arith.constant 0 : i32
    return %c0_i32, %arg1 : i32, i32
  }
  func.func @transform_3(%arg0: i32, %arg1: i32, %arg2: i32) -> (i32, i32) {
    %c0_i32 = arith.constant 0 : i32
    return %arg0, %arg1 : i32, i32
  }
}

</mosaic_0001>

<llo_original>
// kernel: _linear_pallas.1
$region0: #{_linear_pallas.1}
  #allocation0 [shape = 'u32[]', space=smem, size = 0x4, offset = 0x4, fixed_abs, tag = 'smem constant byte address 0x4 - core index']
  #allocation1 [shape = 'u32[72,128]{1,0:T(1,128)}', space=vmem, size = 0x9000, scoped, tag = 'internal scratch']
  #allocation2 [shape = 'f32[16,128]{1,0:T(8,128)}', space=vmem, size = 0x2000, scoped, tag = 'scratch operand']
  %s0 = inlined_call_operand.vmem [shape: f32[16,128], index: 0, kind: input, shape index: {}]
  %s1 = inlined_call_operand.vmem [shape: f32[128,128], index: 1, kind: input, shape index: {}]
  %s2 = inlined_call_operand.vmem [shape: f32[1,128], index: 2, kind: input, shape index: {}]
  %s3 = inlined_call_operand.hbm [shape: f32[16,128], index: 3, kind: output, shape index: {}]
  %s4 = sld [smem:[#allocation0]]
  $region30: #{_linear_pallas.1} parent=0
    _
  %s6 = ssub.s32 1, %s4
  %s7 = scalar_select 0, %s6, %s4
  $region1: #{_linear_pallas.1} parent=0
    #allocation3 [shape = 'u8[8192]{0}', space=vmem, size = 0x2000, scoped, tag = 'output window, operand 0, single buffered']
    #allocation4 [shape = 's32[1]{0}', space=sflag, size = 0x4, scoped, tag = 'scoped memory for _linear_pallas.1']
    %8 = vsyncpa [#allocation4], 0
    // Predicated region
    $region2: #{_linear_pallas.1} parent=1 // pred_check
      _
    $region3: #{_linear_pallas.1} parent=1 // pred_check_branch
      %10 = sbr.rel (0) target = $region5
    $region4: #{_linear_pallas.1} parent=1 // pred_region
      _
    $region5: #{_linear_pallas.1} parent=1 // pred_fallthru
      _
    // Predicated region
    $region6: #{_linear_pallas.1} parent=1 // pred_check
      _
    $region7: #{_linear_pallas.1} parent=1 // pred_check_branch
      %12 = sbr.rel (0) target = $region9
    $region8: #{_linear_pallas.1} parent=1 // pred_region
      _
    $region9: #{_linear_pallas.1} parent=1 // pred_fallthru
      _
    // Predicated region
    $region10: #{_linear_pallas.1} parent=1 // pred_check
      _
    $region11: #{_linear_pallas.1} parent=1 // pred_check_branch
      %14 = sbr.rel (0) target = $region13
    $region12: #{_linear_pallas.1} parent=1 // pred_region
      _
    $region13: #{_linear_pallas.1} parent=1 // pred_fallthru
      _
    %p15 = scmp.eq.s32.totalorder 0, 0
    // Predicated region
    $region14: #{_linear_pallas.1} parent=1 // pred_check
      %p16 = pneg %p15
    $region15: #{_linear_pallas.1} parent=1 // pred_check_branch
      %18 = sbr.rel (%p16) target = $region17
    $region16: #{_linear_pallas.1} parent=1 // pred_region
      %19 = vst [vmem:[#allocation2] sm:$0xff] 0.0
      %20 = vst [vmem:[#allocation2 + $0x8] sm:$0xff] 0.0
    $region17: #{_linear_pallas.1} parent=1 // pred_fallthru
      _
    %v21 = vld [vmem:[#allocation2] sm:$0xff]
    %v22 = vld [vmem:[#allocation2 + $0x8] sm:$0xff]
    %v23 = vld [vmem:[%s0] sm:$0xff]
    %v24 = vld [vmem:[%s0 + $0x8] sm:$0xff]
    %v25 = vld [vmem:[%s1] sm:$0xff]
    %v26 = vld [vmem:[%s1 + $0x8] sm:$0xff]
    %v27 = vld [vmem:[%s1 + $0x10] sm:$0xff]
    %v28 = vld [vmem:[%s1 + $0x18] sm:$0xff]
    %v29 = vld [vmem:[%s1 + $0x20] sm:$0xff]
    %v30 = vld [vmem:[%s1 + $0x28] sm:$0xff]
    %v31 = vld [vmem:[%s1 + $0x30] sm:$0xff]
    %v32 = vld [vmem:[%s1 + $0x38] sm:$0xff]
    %v33 = vld [vmem:[%s1 + $0x40] sm:$0xff]
    %v34 = vld [vmem:[%s1 + $0x48] sm:$0xff]
    %v35 = vld [vmem:[%s1 + $0x50] sm:$0xff]
    %v36 = vld [vmem:[%s1 + $0x58] sm:$0xff]
    %v37 = vld [vmem:[%s1 + $0x60] sm:$0xff]
    %v38 = vld [vmem:[%s1 + $0x68] sm:$0xff]
    %v39 = vld [vmem:[%s1 + $0x70] sm:$0xff]
    %v40 = vld [vmem:[%s1 + $0x78] sm:$0xff]
    %41 = vmatpush.xpose.msra.mxu0 %v40
    %42 = vmatpush.xpose.msra.mxu0 %v39
    %43 = vmatpush.xpose.msra.mxu0 %v38
    %44 = vmatpush.xpose.msra.mxu0 %v37
    %45 = vmatpush.xpose.msra.mxu0 %v36
    %46 = vmatpush.xpose.msra.mxu0 %v35
    %47 = vmatpush.xpose.msra.mxu0 %v34
    %48 = vmatpush.xpose.msra.mxu0 %v33
    %49 = vmatpush.xpose.msra.mxu0 %v32
    %50 = vmatpush.xpose.msra.mxu0 %v31
    %51 = vmatpush.xpose.msra.mxu0 %v30
    %52 = vmatpush.xpose.msra.mxu0 %v29
    %53 = vmatpush.xpose.msra.mxu0 %v28
    %54 = vmatpush.xpose.msra.mxu0 %v27
    %55 = vmatpush.xpose.msra.mxu0 %v26
    %56 = vmatpush.xpose.msra.mxu0 %v25
    %57 = vmatmul.f32.gmra.mxu0 %v23
    %v58 = vpop.f32.mrf.mxu0
    %v59 = vadd.f32 0.0, %v58
    %60 = vmatmul.f32.gmra.mxu0 %v24
    %v61 = vpop.f32.mrf.mxu0
    %v62 = vadd.f32 0.0, %v61
    %63 = vdwg.mxu0
    %v64 = vadd.f32 %v21, %v59
    %v65 = vadd.f32 %v22, %v62
    %66 = vst [vmem:[#allocation2] sm:$0xff] %v64
    %67 = vst [vmem:[#allocation2 + $0x8] sm:$0xff] %v65
    // Predicated region
    $region18: #{_linear_pallas.1} parent=1 // pred_check
      %p68 = pneg %p15
    $region19: #{_linear_pallas.1} parent=1 // pred_check_branch
      %70 = sbr.rel (%p68) target = $region21
    $region20: #{_linear_pallas.1} parent=1 // pred_region
      %v71 = vld [vmem:[#allocation2] sm:$0xff]
      %v72 = vld [vmem:[#allocation2 + $0x8] sm:$0xff]
      %v73 = vld [vmem:[%s2] sm:$0x1]
      %v75 = vperm.slane %v73, 0
      %v77 = vadd.f32 %v71, %v75
      %v78 = vadd.f32 %v72, %v75
      %79 = vst [vmem:[#allocation3] sm:$0xff] %v77
      %80 = vst [vmem:[#allocation3 + $0x8] sm:$0xff] %v78
    $region21: #{_linear_pallas.1} parent=1 // pred_fallthru
      _
    // Predicated region
    $region22: #{_linear_pallas.1} parent=1 // pred_check
      _
    $region23: #{_linear_pallas.1} parent=1 // pred_check_branch
      %82 = sbr.rel (0) target = $region25
    $region24: #{_linear_pallas.1} parent=1 // pred_region
      %84 = vsyncadd [#allocation4], 0
      %s85 = sshll.u32 [#allocation3], 4
      %s86 = int_to_ptr.vmem [resolvable:$true] %s85
      %s87 = sshll.u32 %s3, 4
      %s88 = int_to_ptr.hbm [resolvable:$true] %s87
      %93 = dma.vmem_to_hbm [thread:$0]  %s86, 256, %s88, [#allocation4], 128, 128, 8
    $region25: #{_linear_pallas.1} parent=1 // pred_fallthru
      _
    // Predicated region
    $region26: #{_linear_pallas.1} parent=1 // pred_check
      _
    $region27: #{_linear_pallas.1} parent=1 // pred_check_branch
      %95 = sbr.rel (0) target = $region29
    $region28: #{_linear_pallas.1} parent=1 // pred_region
      %97 = dma.done [#allocation4], 256
    $region29: #{_linear_pallas.1} parent=1 // pred_fallthru
      _
    %98 = vsyncpa [#allocation4], 1

</llo_original>
